<compile_context>
chip_gen: v5e
topology: v5e:2x2
jax: 0.10.0
libtpu: 0.0.40
codegen_flags: <defaults>
</compile_context>

<pallas_src>
import math

import jax
import jax.numpy as jnp
from jax.experimental import pallas as pl
from jax.experimental.pallas import tpu as pltpu


def _cdiv(a, b):
    return (a + b - 1) // b


def _round_up(a, b):
    return _cdiv(a, b) * b


def _vmem_budget():
    """Scoped-VMEM budget derived from the actual part (v7x: 64 MiB, v5e/v6e: 128 MiB)."""
    phys = 64 * 1024 * 1024  # conservative fallback if the query is unavailable
    try:
        info = pltpu.get_tpu_info()
        phys = int(getattr(info, "vmem_capacity_bytes", phys))
    except Exception:
        pass
    return max(32 * 1024 * 1024, min(phys - 16 * 1024 * 1024, 100 * 1024 * 1024))


def _pick_time_tile(T_out, C_in, C_out, k, s, vmem_budget):
    """Largest lane-aligned time tile whose (double-buffered) working set fits the budget."""
    cap = 1024 if vmem_budget >= 80 * 1024 * 1024 else 512
    tT = min(cap, _round_up(T_out, 128))

    def est(tt):
        main = s * C_in * tt * 2            # bf16 polyphase window block
        halo = s * C_in * 128 * 2
        w = C_out * k * C_in * 2
        y = C_out * tt * 2
        st = 2 * C_out * 128 * 4
        return 2 * (main + halo + w + y + st) + (k * C_in + C_out) * tt * 4

    while tT > 128 and est(tT) > vmem_budget // 2:
        tT -= 128
    return tT


# ---------------------------------------------------------------------------
# Pass 1: conv as a single MXU contraction + masked single-pass GroupNorm stats
# ---------------------------------------------------------------------------
def _make_conv_stats_kernel(*, K, s, C_in, C_out, tT, T_out, nT):
    n128 = tT // 128
    has_tail = (T_out % tT) != 0
    # Layer-1 style inputs (C_in not sublane-aligned) stage the im2col operand in f32 for a
    # robust sublane concat, then cast once; aligned layers stay in bf16 end-to-end.
    stage_dt = jnp.bfloat16 if (C_in % 8 == 0) else jnp.float32

    def kernel(main_ref, halo_ref, w_ref, y_ref, stats_ref):
        # main_ref:  (1, s*C_in, tT)    bf16  polyphase window: row r*C_in+c, col m = x[c, m*s+r]
        # halo_ref:  (1, s*C_in, 128)   bf16  next 128 phase-domain columns (conv overhang)
        # w_ref:     (C_out, K*C_in)    bf16  tap-major flattened conv weight
        # y_ref:     (1, C_out, tT)     bf16  conv output tile
        # stats_ref: (1, 2, C_out, 128) f32   per-sample running [sum, sum_sq] (resident over t)
        t = pl.program_id(1)

        @pl.when(t == 0)
        def _init():
            stats_ref[...] = jnp.zeros_like(stats_ref)

        # Assemble the (K*C_in, tT) operand in VMEM (small static lane shifts only) and run
        # ONE MXU contraction -- no per-tap f32 adds, first layer (C_in == 1) included.
        rows = []
        for kk in range(K):
            r, q = kk % s, kk // s
            lo = r * C_in
            if q == 0:
                xs = main_ref[0, lo:lo + C_in, :].astype(stage_dt)
            else:
                xs = jnp.concatenate(
                    [main_ref[0, lo:lo + C_in, q:].astype(stage_dt),
                     halo_ref[0, lo:lo + C_in, :q].astype(stage_dt)],
                    axis=-1)
            rows.append(xs)
        x_mat = jnp.concatenate(rows, axis=0).astype(jnp.bfloat16)      # (K*C_in, tT)
        acc = jnp.dot(w_ref[...], x_mat,
                      preferred_element_type=jnp.float32)               # (C_out, tT) f32

        def _accum(vals):
            psum = jnp.zeros((C_out, 128), jnp.float32)
            psq = jnp.zeros((C_out, 128), jnp.float32)
            for g in range(n128):
                blk = vals[:, g * 128:(g + 1) * 128]
                psum = psum + blk
                psq = psq + blk * blk
            stats_ref[0, 0] += psum                                      # one RMW per tile
            stats_ref[0, 1] += psq

        if has_tail:
            # Only the last time tile has padded columns -> mask only there.
            @pl.when(t < nT - 1)
            def _full():
                _accum(acc)

            @pl.when(t == nT - 1)
            def _tail():
                col = jax.lax.broadcasted_iota(jnp.int32, (1, tT), 1) + (nT - 1) * tT
                _accum(jnp.where(col < T_out, acc, 0.0))
        else:
            _accum(acc)

        y_ref[0] = acc.astype(y_ref.dtype)

    return kernel


# ---------------------------------------------------------------------------
# Pass 2: y*a + b (pre-folded GroupNorm+affine), ReLU, residual*scale, optional log(|x|+1)
# ---------------------------------------------------------------------------
def _make_norm_kernel(*, tT, T_out, nT, scale, res_mode, apply_log):
    has_tail = (T_out % tT) != 0

    def kernel(y_ref, a_ref, b_ref, *rest):
        # y_ref: (1, C_out, tT) bf16 | a_ref, b_ref: (1, C_out, 1) f32 folded scale / shift
        # optional r_ref: residual tile (phase-0 rows of the polyphase input, or precomputed)
        if res_mode == "none":
            (o_ref,) = rest
            r_ref = None
        else:
            r_ref, o_ref = rest
        t = pl.program_id(1)

        y = y_ref[0].astype(jnp.float32)
        act = jnp.maximum(y * a_ref[0] + b_ref[0], 0.0)
        if res_mode != "none":
            act = (act + r_ref[0].astype(jnp.float32)) * scale
        if apply_log:
            act = jnp.log(jnp.abs(act) + 1.0)

        def _store(vals):
            o_ref[0] = vals.astype(o_ref.dtype)

        if has_tail:
            @pl.when(t < nT - 1)
            def _full():
                _store(act)

            @pl.when(t == nT - 1)
            def _tail():
                col = jax.lax.broadcasted_iota(jnp.int32, (1, tT), 1) + (nT - 1) * tT
                _store(jnp.where(col < T_out, act, 0.0))
        else:
            _store(act)

    return kernel


# ---------------------------------------------------------------------------
# One conv block (wrapper glue + the two pallas_calls)
# ---------------------------------------------------------------------------
def _conv_block(h, T_valid, w, gamma, beta, *, k, s, C_out, skip, scale, apply_log,
                out_dtype, vmem_limit, eps=1e-5):
    """h: (B, C_in, >=T_valid); columns >= T_valid are zero. Returns (out_padded, T_out)."""
    B, C_in, T_stored = h.shape
    T_out = (T_valid - k) // s + 1
    assert T_out > 0

    tT = _pick_time_tile(T_out, C_in, C_out, k, s, vmem_limit)
    nT = _cdiv(T_out, tT)
    T_out_pad = nT * tT
    hblk = tT // 128
    M_pad = nT * tT + 128              # + one 128-wide halo block, always in bounds
    T_need = M_pad * s

    # Polyphase relayout: ph[b, r*C_in + c, m] = h[b, c, m*s + r]  (bf16).
    # One fused XLA pad+transpose; replaces the old per-tile stacked-window materialization.
    hb = h.astype(jnp.bfloat16)
    if T_stored < T_need:
        hb = jnp.pad(hb, ((0, 0), (0, 0), (0, T_need - T_stored)))
    else:
        hb = hb[:, :, :T_need]
    ph = hb.reshape(B, C_in, M_pad, s).transpose(0, 3, 1, 2).reshape(B, s * C_in, M_pad)

    # Tap-major flattened weight: w_mat[o, kk*C_in + c] = w[o, c, kk].
    w_mat = jnp.transpose(w, (0, 2, 1)).reshape(C_out, k * C_in).astype(jnp.bfloat16)

    # ---- pass 1: conv + stats ----------------------------------------------
    y_pad, stats = pl.pallas_call(
        _make_conv_stats_kernel(K=k, s=s, C_in=C_in, C_out=C_out, tT=tT, T_out=T_out, nT=nT),
        grid=(B, nT),
        in_specs=[
            pl.BlockSpec((1, s * C_in, tT), lambda b, t: (b, 0, t)),
            pl.BlockSpec((1, s * C_in, 128), lambda b, t: (b, 0, (t + 1) * hblk)),
            pl.BlockSpec((C_out, k * C_in), lambda b, t: (0, 0)),
        ],
        out_specs=[
            pl.BlockSpec((1, C_out, tT), lambda b, t: (b, 0, t)),
            pl.BlockSpec((1, 2, C_out, 128), lambda b, t: (b, 0, 0, 0)),
        ],
        out_shape=[
            jax.ShapeDtypeStruct((B, C_out, T_out_pad), jnp.bfloat16),
            jax.ShapeDtypeStruct((B, 2, C_out, 128), jnp.float32),
        ],
        compiler_params=pltpu.CompilerParams(
            dimension_semantics=("parallel", "arbitrary"),
            vmem_limit_bytes=vmem_limit,
        ),
    )(ph, ph, w_mat)

    # ---- fold GroupNorm(1 group) stats + affine into per-(sample, channel) a, b ---------
    if gamma is None:
        gamma = jnp.ones((C_out,), jnp.float32)
    if beta is None:
        beta = jnp.zeros((C_out,), jnp.float32)
    gamma = gamma.reshape(-1).astype(jnp.float32)
    beta = beta.reshape(-1).astype(jnp.float32)
    cnt = float(C_out * T_out)
    ssum = jnp.sum(stats[:, 0], axis=(1, 2))                       # (B,)
    ssq = jnp.sum(stats[:, 1], axis=(1, 2))
    mean = ssum / cnt
    var = jnp.maximum(ssq / cnt - mean * mean, 0.0)
    rstd = jax.lax.rsqrt(var + eps)
    a_aff = gamma[None, :] * rstd[:, None]                         # (B, C_out)
    b_aff = beta[None, :] - mean[:, None] * a_aff
    a_aff = a_aff[:, :, None]
    b_aff = b_aff[:, :, None]

    # ---- residual source (no zeros residual is ever materialized) -----------------------
    if skip:
        step = T_valid // T_out
        if step == s:
            res_mode = "phase"          # residual h[..., ::s] == phase-0 rows of ph
            res_arg = ph
            res_spec = pl.BlockSpec((1, C_in, tT), lambda b, t: (b, 0, t))
        else:
            # TODO(synk): rare case (T_in // T_out != stride) falls back to a wrapper-side strided copy.
            res_mode = "array"
            res = h[:, :, ::step][:, :, :T_out].astype(jnp.float32)
            res_arg = jnp.pad(res, ((0, 0), (0, 0), (0, T_out_pad - T_out)))
            res_spec = pl.BlockSpec((1, C_out, tT), lambda b, t: (b, 0, t))
    else:
        res_mode, res_arg, res_spec = "none", None, None

    in_specs = [
        pl.BlockSpec((1, C_out, tT), lambda b, t: (b, 0, t)),
        pl.BlockSpec((1, C_out, 1), lambda b, t: (b, 0, 0)),
        pl.BlockSpec((1, C_out, 1), lambda b, t: (b, 0, 0)),
    ]
    args = [y_pad, a_aff, b_aff]
    if res_mode != "none":
        in_specs.append(res_spec)
        args.append(res_arg)

    out = pl.pallas_call(
        _make_norm_kernel(tT=tT, T_out=T_out, nT=nT, scale=scale,
                          res_mode=res_mode, apply_log=apply_log),
        grid=(B, nT),
        in_specs=in_specs,
        out_specs=pl.BlockSpec((1, C_out, tT), lambda b, t: (b, 0, t)),
        out_shape=jax.ShapeDtypeStruct((B, C_out, T_out_pad), out_dtype),
        compiler_params=pltpu.CompilerParams(
            dimension_semantics=("parallel", "parallel"),
            vmem_limit_bytes=vmem_limit,
        ),
    )(*args)

    return out, T_out


# ---------------------------------------------------------------------------
# Forward pass
# ---------------------------------------------------------------------------
def conv_feature_extraction_forward(
    x, params, conv_layers, *, log_compression, skip_connections, residual_scale
):
    """x: (B, T) float32.  Returns (B, C_last, T_last) float32."""
    res_scale = math.sqrt(residual_scale)
    vmem_limit = _vmem_budget()
    h = x[:, None, :].astype(jnp.float32)              # unsqueeze(1) -> (B, 1, T)
    T_valid = h.shape[2]
    n_layers = len(conv_layers)

    for li, ((w, gamma, beta), (dim, k, stride)) in enumerate(zip(params, conv_layers)):
        C_in = h.shape[1]
        last = li == n_layers - 1
        h, T_valid = _conv_block(
            h, T_valid, w, gamma, beta,
            k=k, s=stride, C_out=dim,
            skip=bool(skip_connections and dim == C_in),
            scale=res_scale,
            apply_log=bool(log_compression and last),
            out_dtype=jnp.float32 if last else jnp.bfloat16,   # bf16 between layers
            vmem_limit=vmem_limit,
        )

    return h[:, :, :T_valid]


# ---------------------------------------------------------------------------
# Pure-JAX reference (mirrors the PyTorch forward) for a correctness check
# ---------------------------------------------------------------------------
def reference_forward(
    x, params, conv_layers, *, log_compression, skip_connections, residual_scale, eps=1e-5
):
    res_scale = math.sqrt(residual_scale)
    h = x[:, None, :].astype(jnp.float32)
    for (w, gamma, beta), (dim, k, stride) in zip(params, conv_layers):
        C_in = h.shape[1]
        y = jax.lax.conv_general_dilated(
            h, w, (stride,), "VALID", dimension_numbers=("NCH", "OIH", "NCH")
        )
        mean = jnp.mean(y, axis=(1, 2), keepdims=True)
        var = jnp.mean((y - mean) ** 2, axis=(1, 2), keepdims=True)
        y_n = (y - mean) * jax.lax.rsqrt(var + eps)
        y_n = y_n * gamma.reshape(1, -1, 1) + beta.reshape(1, -1, 1)
        act = jnp.maximum(y_n, 0.0)
        if skip_connections and dim == C_in:
            T_in, T_out = h.shape[2], act.shape[2]
            residual = h[:, :, :: T_in // T_out][:, :, :T_out]
            act = (act + residual) * res_scale
        h = act
    if log_compression:
        h = jnp.log(jnp.abs(h) + 1.0)
    return h


# ---------------------------------------------------------------------------
if __name__ == "__main__":
    key = jax.random.PRNGKey(0)

    # (dim, kernel, stride) per layer; layers 2 & 3 keep channel count -> skip connections fire.
    conv_layers = [(16, 10, 5), (16, 8, 4), (16, 4, 2)]
    B, T = 2, 256
    log_compression = True
    skip_connections = True
    residual_scale = 0.5

    key, xk = jax.random.split(key)
    x = jax.random.normal(xk, (B, T), jnp.float32)

    # Deterministic synthetic parameters (shapes from the PyTorch __init__).
    params = []
    in_d = 1
    for dim, k, stride in conv_layers:
        key, wk, gk, bk = jax.random.split(key, 4)
        w = jax.random.normal(wk, (dim, in_d, k), jnp.float32) / math.sqrt(in_d * k)
        gamma = 1.0 + 0.1 * jax.random.normal(gk, (dim, 1), jnp.float32)
        beta = 0.1 * jax.random.normal(bk, (dim, 1), jnp.float32)
        params.append((w, gamma, beta))
        in_d = dim

    out = conv_feature_extraction_forward(
        x, params, conv_layers,
        log_compression=log_compression,
        skip_connections=skip_connections,
        residual_scale=residual_scale,
    )
    out = jax.block_until_ready(out)

    ref = reference_forward(
        x, params, conv_layers,
        log_compression=log_compression,
        skip_connections=skip_connections,
        residual_scale=residual_scale,
    )
    assert out.shape == ref.shape, (out.shape, ref.shape)
    if not jnp.allclose(out, ref, atol=5e-2, rtol=5e-2):
        raise AssertionError(
            f"mismatch vs reference, max abs err = {jnp.max(jnp.abs(out - ref)):.3e}"
        )

    print("KERNEL_OK")
</pallas_src>

<mosaic_0001>
module attributes {stable_mosaic.version = 11 : i64} {
  func.func @kernel(%arg0: i32, %arg1: i32, %arg2: memref<1x5x128xbf16, #tpu.memory_space<vmem>>, %arg3: memref<1x5x128xbf16, #tpu.memory_space<vmem>>, %arg4: memref<16x10xbf16, #tpu.memory_space<vmem>>, %arg5: memref<1x16x128xbf16, #tpu.memory_space<vmem>>, %arg6: memref<1x2x16x128xf32, #tpu.memory_space<vmem>>) attributes {dimension_semantics = [#tpu.dimension_semantics<parallel>, #tpu.dimension_semantics<arbitrary>], iteration_bounds = array<i64: 2, 1>, scalar_prefetch = 0 : i64, scratch_operands = 0 : i64, tpu.core_type = #tpu.core_type<tc>, window_params = [{transform_indices = @transform_0, window_bounds = array<i64: 1, 5, 128>}, {transform_indices = @transform_1, window_bounds = array<i64: 1, 5, 128>}, {pipeline_mode = #tpu.pipeline_mode<synchronous>, transform_indices = @transform_2, window_bounds = array<i64: 16, 10>}, {transform_indices = @transform_3, window_bounds = array<i64: 1, 16, 128>}, {transform_indices = @transform_4, window_bounds = array<i64: 1, 2, 16, 128>}]} {
    %c0_i32 = arith.constant 0 : i32
    %0 = arith.cmpi eq, %arg1, %c0_i32 : i32
    %1 = arith.extui %0 : i1 to i32
    %c0_i32_0 = arith.constant 0 : i32
    %2 = arith.cmpi ne, %1, %c0_i32_0 : i32
    scf.if %2 {
      %cst_50 = arith.constant 0.000000e+00 : f32
      %67 = vector.broadcast %cst_50 : f32 to vector<1x2x16x128xf32>
      %c0_51 = arith.constant 0 : index
      %c0_52 = arith.constant 0 : index
      %c0_53 = arith.constant 0 : index
      %c0_54 = arith.constant 0 : index
      %68 = vector.load %arg6[%c0_51, %c0_52, %c0_53, %c0_54] : memref<1x2x16x128xf32, #tpu.memory_space<vmem>>, vector<1x2x16x128xf32>
      tpu.vector_store %arg6[%c0_51, %c0_52, %c0_53, %c0_54], %67 {strides = array<i32>} : memref<1x2x16x128xf32, #tpu.memory_space<vmem>>, vector<1x2x16x128xf32>,
    } else {
    }
    %c0 = arith.constant 0 : index
    %c0_1 = arith.constant 0 : index
    %c0_2 = arith.constant 0 : index
    %3 = vector.load %arg2[%c0, %c0_1, %c0_2] : memref<1x5x128xbf16, #tpu.memory_space<vmem>>, vector<1x1x128xbf16>
    %4 = vector.shape_cast %3 : vector<1x1x128xbf16> to vector<1x128xbf16>
    %5 = arith.extf %4 : vector<1x128xbf16> to vector<1x128xf32>
    %c0_3 = arith.constant 0 : index
    %c1 = arith.constant 1 : index
    %c0_4 = arith.constant 0 : index
    %6 = vector.load %arg2[%c0_3, %c1, %c0_4] : memref<1x5x128xbf16, #tpu.memory_space<vmem>>, vector<1x1x128xbf16>
    %7 = vector.shape_cast %6 : vector<1x1x128xbf16> to vector<1x128xbf16>
    %8 = arith.extf %7 : vector<1x128xbf16> to vector<1x128xf32>
    %c0_5 = arith.constant 0 : index
    %c2 = arith.constant 2 : index
    %c0_6 = arith.constant 0 : index
    %9 = vector.load %arg2[%c0_5, %c2, %c0_6] : memref<1x5x128xbf16, #tpu.memory_space<vmem>>, vector<1x1x128xbf16>
    %10 = vector.shape_cast %9 : vector<1x1x128xbf16> to vector<1x128xbf16>
    %11 = arith.extf %10 : vector<1x128xbf16> to vector<1x128xf32>
    %c0_7 = arith.constant 0 : index
    %c3 = arith.constant 3 : index
    %c0_8 = arith.constant 0 : index
    %12 = vector.load %arg2[%c0_7, %c3, %c0_8] : memref<1x5x128xbf16, #tpu.memory_space<vmem>>, vector<1x1x128xbf16>
    %13 = vector.shape_cast %12 : vector<1x1x128xbf16> to vector<1x128xbf16>
    %14 = arith.extf %13 : vector<1x128xbf16> to vector<1x128xf32>
    %c0_9 = arith.constant 0 : index
    %c4 = arith.constant 4 : index
    %c0_10 = arith.constant 0 : index
    %15 = vector.load %arg2[%c0_9, %c4, %c0_10] : memref<1x5x128xbf16, #tpu.memory_space<vmem>>, vector<1x1x128xbf16>
    %16 = vector.shape_cast %15 : vector<1x1x128xbf16> to vector<1x128xbf16>
    %17 = arith.extf %16 : vector<1x128xbf16> to vector<1x128xf32>
    %c0_11 = arith.constant 0 : index
    %c0_12 = arith.constant 0 : index
    %c1_13 = arith.constant 1 : index
    %18 = vector.load %arg2[%c0_11, %c0_12, %c1_13] : memref<1x5x128xbf16, #tpu.memory_space<vmem>>, vector<1x1x127xbf16>
    %19 = vector.shape_cast %18 : vector<1x1x127xbf16> to vector<1x127xbf16>
    %20 = arith.extf %19 : vector<1x127xbf16> to vector<1x127xf32>
    %c0_14 = arith.constant 0 : index
    %c0_15 = arith.constant 0 : index
    %c0_16 = arith.constant 0 : index
    %21 = vector.load %arg3[%c0_14, %c0_15, %c0_16] : memref<1x5x128xbf16, #tpu.memory_space<vmem>>, vector<1x1x1xbf16>
    %22 = vector.shape_cast %21 : vector<1x1x1xbf16> to vector<1x1xbf16>
    %23 = arith.extf %22 : vector<1x1xbf16> to vector<1x1xf32>
    %24 = tpu.concatenate %20, %23 in 1 : vector<1x127xf32>, vector<1x1xf32> -> vector<1x128xf32>
    %c0_17 = arith.constant 0 : index
    %c1_18 = arith.constant 1 : index
    %c1_19 = arith.constant 1 : index
    %25 = vector.load %arg2[%c0_17, %c1_18, %c1_19] : memref<1x5x128xbf16, #tpu.memory_space<vmem>>, vector<1x1x127xbf16>
    %26 = vector.shape_cast %25 : vector<1x1x127xbf16> to vector<1x127xbf16>
    %27 = arith.extf %26 : vector<1x127xbf16> to vector<1x127xf32>
    %c0_20 = arith.constant 0 : index
    %c1_21 = arith.constant 1 : index
    %c0_22 = arith.constant 0 : index
    %28 = vector.load %arg3[%c0_20, %c1_21, %c0_22] : memref<1x5x128xbf16, #tpu.memory_space<vmem>>, vector<1x1x1xbf16>
    %29 = vector.shape_cast %28 : vector<1x1x1xbf16> to vector<1x1xbf16>
    %30 = arith.extf %29 : vector<1x1xbf16> to vector<1x1xf32>
    %31 = tpu.concatenate %27, %30 in 1 : vector<1x127xf32>, vector<1x1xf32> -> vector<1x128xf32>
    %c0_23 = arith.constant 0 : index
    %c2_24 = arith.constant 2 : index
    %c1_25 = arith.constant 1 : index
    %32 = vector.load %arg2[%c0_23, %c2_24, %c1_25] : memref<1x5x128xbf16, #tpu.memory_space<vmem>>, vector<1x1x127xbf16>
    %33 = vector.shape_cast %32 : vector<1x1x127xbf16> to vector<1x127xbf16>
    %34 = arith.extf %33 : vector<1x127xbf16> to vector<1x127xf32>
    %c0_26 = arith.constant 0 : index
    %c2_27 = arith.constant 2 : index
    %c0_28 = arith.constant 0 : index
    %35 = vector.load %arg3[%c0_26, %c2_27, %c0_28] : memref<1x5x128xbf16, #tpu.memory_space<vmem>>, vector<1x1x1xbf16>
    %36 = vector.shape_cast %35 : vector<1x1x1xbf16> to vector<1x1xbf16>
    %37 = arith.extf %36 : vector<1x1xbf16> to vector<1x1xf32>
    %38 = tpu.concatenate %34, %37 in 1 : vector<1x127xf32>, vector<1x1xf32> -> vector<1x128xf32>
    %c0_29 = arith.constant 0 : index
    %c3_30 = arith.constant 3 : index
    %c1_31 = arith.constant 1 : index
    %39 = vector.load %arg2[%c0_29, %c3_30, %c1_31] : memref<1x5x128xbf16, #tpu.memory_space<vmem>>, vector<1x1x127xbf16>
    %40 = vector.shape_cast %39 : vector<1x1x127xbf16> to vector<1x127xbf16>
    %41 = arith.extf %40 : vector<1x127xbf16> to vector<1x127xf32>
    %c0_32 = arith.constant 0 : index
    %c3_33 = arith.constant 3 : index
    %c0_34 = arith.constant 0 : index
    %42 = vector.load %arg3[%c0_32, %c3_33, %c0_34] : memref<1x5x128xbf16, #tpu.memory_space<vmem>>, vector<1x1x1xbf16>
    %43 = vector.shape_cast %42 : vector<1x1x1xbf16> to vector<1x1xbf16>
    %44 = arith.extf %43 : vector<1x1xbf16> to vector<1x1xf32>
    %45 = tpu.concatenate %41, %44 in 1 : vector<1x127xf32>, vector<1x1xf32> -> vector<1x128xf32>
    %c0_35 = arith.constant 0 : index
    %c4_36 = arith.constant 4 : index
    %c1_37 = arith.constant 1 : index
    %46 = vector.load %arg2[%c0_35, %c4_36, %c1_37] : memref<1x5x128xbf16, #tpu.memory_space<vmem>>, vector<1x1x127xbf16>
    %47 = vector.shape_cast %46 : vector<1x1x127xbf16> to vector<1x127xbf16>
    %48 = arith.extf %47 : vector<1x127xbf16> to vector<1x127xf32>
    %c0_38 = arith.constant 0 : index
    %c4_39 = arith.constant 4 : index
    %c0_40 = arith.constant 0 : index
    %49 = vector.load %arg3[%c0_38, %c4_39, %c0_40] : memref<1x5x128xbf16, #tpu.memory_space<vmem>>, vector<1x1x1xbf16>
    %50 = vector.shape_cast %49 : vector<1x1x1xbf16> to vector<1x1xbf16>
    %51 = arith.extf %50 : vector<1x1xbf16> to vector<1x1xf32>
    %52 = tpu.concatenate %48, %51 in 1 : vector<1x127xf32>, vector<1x1xf32> -> vector<1x128xf32>
    %53 = tpu.concatenate %5, %8, %11, %14, %17, %24, %31, %38, %45, %52 in 0 : vector<1x128xf32>, vector<1x128xf32>, vector<1x128xf32>, vector<1x128xf32>, vector<1x128xf32>, vector<1x128xf32>, vector<1x128xf32>, vector<1x128xf32>, vector<1x128xf32>, vector<1x128xf32> -> vector<10x128xf32>
    %54 = arith.truncf %53 : vector<10x128xf32> to vector<10x128xbf16>
    %c0_41 = arith.constant 0 : index
    %c0_42 = arith.constant 0 : index
    %55 = vector.load %arg4[%c0_41, %c0_42] : memref<16x10xbf16, #tpu.memory_space<vmem>>, vector<16x10xbf16>
    %cst = arith.constant dense<0.000000e+00> : vector<16x128xf32>
    %56 = tpu.matmul %55, %54, %cst {dimension_numbers = #tpu.dot_dimension_numbers<[1], [0], [0], [1], [0, 0, 1, 1], [], []>} : vector<16x10xbf16>, vector<10x128xbf16>, vector<16x128xf32> -> vector<16x128xf32>
    %c0_i32_43 = arith.constant 0 : i32
    %57 = arith.cmpi slt, %arg1, %c0_i32_43 : i32
    %58 = arith.extui %57 : i1 to i32
    %c0_i32_44 = arith.constant 0 : i32
    %59 = arith.cmpi ne, %58, %c0_i32_44 : i32
    scf.if %59 {
      %cst_50 = arith.constant 0.000000e+00 : f32
      %67 = vector.broadcast %cst_50 : f32 to vector<16x128xf32>
      %cst_51 = arith.constant 0.000000e+00 : f32
      %68 = vector.broadcast %cst_51 : f32 to vector<16x128xf32>
      %69 = arith.addf %67, %56 : vector<16x128xf32>
      %70 = arith.mulf %56, %56 : vector<16x128xf32>
      %71 = arith.addf %68, %70 : vector<16x128xf32>
      %c0_52 = arith.constant 0 : index
      %c0_53 = arith.constant 0 : index
      %c0_54 = arith.constant 0 : index
      %c0_55 = arith.constant 0 : index
      %72 = vector.load %arg6[%c0_52, %c0_53, %c0_54, %c0_55] : memref<1x2x16x128xf32, #tpu.memory_space<vmem>>, vector<1x1x16x128xf32>
      %73 = vector.shape_cast %72 : vector<1x1x16x128xf32> to vector<16x128xf32>
      %74 = arith.addf %73, %69 : vector<16x128xf32>
      %c0_56 = arith.constant 0 : index
      %c0_57 = arith.constant 0 : index
      %c0_58 = arith.constant 0 : index
      %c0_59 = arith.constant 0 : index
      %75 = vector.load %arg6[%c0_56, %c0_57, %c0_58, %c0_59] : memref<1x2x16x128xf32, #tpu.memory_space<vmem>>, vector<1x1x16x128xf32>
      %76 = vector.shape_cast %75 : vector<1x1x16x128xf32> to vector<16x128xf32>
      %77 = vector.shape_cast %74 : vector<16x128xf32> to vector<1x1x16x128xf32>
      tpu.vector_store %arg6[%c0_56, %c0_57, %c0_58, %c0_59], %77 {strides = array<i32>} : memref<1x2x16x128xf32, #tpu.memory_space<vmem>>, vector<1x1x16x128xf32>,
      %c0_60 = arith.constant 0 : index
      %c1_61 = arith.constant 1 : index
      %c0_62 = arith.constant 0 : index
      %c0_63 = arith.constant 0 : index
      %78 = vector.load %arg6[%c0_60, %c1_61, %c0_62, %c0_63] : memref<1x2x16x128xf32, #tpu.memory_space<vmem>>, vector<1x1x16x128xf32>
      %79 = vector.shape_cast %78 : vector<1x1x16x128xf32> to vector<16x128xf32>
      %80 = arith.addf %79, %71 : vector<16x128xf32>
      %c0_64 = arith.constant 0 : index
      %c1_65 = arith.constant 1 : index
      %c0_66 = arith.constant 0 : index
      %c0_67 = arith.constant 0 : index
      %81 = vector.load %arg6[%c0_64, %c1_65, %c0_66, %c0_67] : memref<1x2x16x128xf32, #tpu.memory_space<vmem>>, vector<1x1x16x128xf32>
      %82 = vector.shape_cast %81 : vector<1x1x16x128xf32> to vector<16x128xf32>
      %83 = vector.shape_cast %80 : vector<16x128xf32> to vector<1x1x16x128xf32>
      tpu.vector_store %arg6[%c0_64, %c1_65, %c0_66, %c0_67], %83 {strides = array<i32>} : memref<1x2x16x128xf32, #tpu.memory_space<vmem>>, vector<1x1x16x128xf32>,
    } else {
    }
    %c0_i32_45 = arith.constant 0 : i32
    %60 = arith.cmpi eq, %arg1, %c0_i32_45 : i32
    %61 = arith.extui %60 : i1 to i32
    %c0_i32_46 = arith.constant 0 : i32
    %62 = arith.cmpi ne, %61, %c0_i32_46 : i32
    scf.if %62 {
      %67 = tpu.iota {dimensions = array<i32: 1>} : vector<1x128xi32>
      %c0_i32_50 = arith.constant 0 : i32
      %68 = vector.broadcast %c0_i32_50 : i32 to vector<1x128xi32>
      %69 = arith.addi %67, %68 : vector<1x128xi32>
      %c50_i32 = arith.constant 50 : i32
      %70 = vector.broadcast %c50_i32 : i32 to vector<1x128xi32>
      %71 = arith.cmpi slt, %69, %70 : vector<1x128xi32>
      %cst_51 = arith.constant 0.000000e+00 : f32
      %72 = vector.shape_cast %71 : vector<1x128xi1> to vector<1x128xi1>
      %73 = vector.broadcast %72 : vector<1x128xi1> to vector<16x128xi1>
      %74 = vector.broadcast %cst_51 : f32 to vector<16x128xf32>
      %75 = arith.select %73, %56, %74 : vector<16x128xi1>, vector<16x128xf32>
      %cst_52 = arith.constant 0.000000e+00 : f32
      %76 = vector.broadcast %cst_52 : f32 to vector<16x128xf32>
      %cst_53 = arith.constant 0.000000e+00 : f32
      %77 = vector.broadcast %cst_53 : f32 to vector<16x128xf32>
      %78 = arith.addf %76, %75 : vector<16x128xf32>
      %79 = arith.mulf %75, %75 : vector<16x128xf32>
      %80 = arith.addf %77, %79 : vector<16x128xf32>
      %c0_54 = arith.constant 0 : index
      %c0_55 = arith.constant 0 : index
      %c0_56 = arith.constant 0 : index
      %c0_57 = arith.constant 0 : index
      %81 = vector.load %arg6[%c0_54, %c0_55, %c0_56, %c0_57] : memref<1x2x16x128xf32, #tpu.memory_space<vmem>>, vector<1x1x16x128xf32>
      %82 = vector.shape_cast %81 : vector<1x1x16x128xf32> to vector<16x128xf32>
      %83 = arith.addf %82, %78 : vector<16x128xf32>
      %c0_58 = arith.constant 0 : index
      %c0_59 = arith.constant 0 : index
      %c0_60 = arith.constant 0 : index
      %c0_61 = arith.constant 0 : index
      %84 = vector.load %arg6[%c0_58, %c0_59, %c0_60, %c0_61] : memref<1x2x16x128xf32, #tpu.memory_space<vmem>>, vector<1x1x16x128xf32>
      %85 = vector.shape_cast %84 : vector<1x1x16x128xf32> to vector<16x128xf32>
      %86 = vector.shape_cast %83 : vector<16x128xf32> to vector<1x1x16x128xf32>
      tpu.vector_store %arg6[%c0_58, %c0_59, %c0_60, %c0_61], %86 {strides = array<i32>} : memref<1x2x16x128xf32, #tpu.memory_space<vmem>>, vector<1x1x16x128xf32>,
      %c0_62 = arith.constant 0 : index
      %c1_63 = arith.constant 1 : index
      %c0_64 = arith.constant 0 : index
      %c0_65 = arith.constant 0 : index
      %87 = vector.load %arg6[%c0_62, %c1_63, %c0_64, %c0_65] : memref<1x2x16x128xf32, #tpu.memory_space<vmem>>, vector<1x1x16x128xf32>
      %88 = vector.shape_cast %87 : vector<1x1x16x128xf32> to vector<16x128xf32>
      %89 = arith.addf %88, %80 : vector<16x128xf32>
      %c0_66 = arith.constant 0 : index
      %c1_67 = arith.constant 1 : index
      %c0_68 = arith.constant 0 : index
      %c0_69 = arith.constant 0 : index
      %90 = vector.load %arg6[%c0_66, %c1_67, %c0_68, %c0_69] : memref<1x2x16x128xf32, #tpu.memory_space<vmem>>, vector<1x1x16x128xf32>
      %91 = vector.shape_cast %90 : vector<1x1x16x128xf32> to vector<16x128xf32>
      %92 = vector.shape_cast %89 : vector<16x128xf32> to vector<1x1x16x128xf32>
      tpu.vector_store %arg6[%c0_66, %c1_67, %c0_68, %c0_69], %92 {strides = array<i32>} : memref<1x2x16x128xf32, #tpu.memory_space<vmem>>, vector<1x1x16x128xf32>,
    } else {
    }
    %63 = arith.truncf %56 : vector<16x128xf32> to vector<16x128xbf16>
    %c0_47 = arith.constant 0 : index
    %c0_48 = arith.constant 0 : index
    %c0_49 = arith.constant 0 : index
    %64 = vector.load %arg5[%c0_47, %c0_48, %c0_49] : memref<1x16x128xbf16, #tpu.memory_space<vmem>>, vector<1x16x128xbf16>
    %65 = vector.shape_cast %64 : vector<1x16x128xbf16> to vector<16x128xbf16>
    %66 = vector.shape_cast %63 : vector<16x128xbf16> to vector<1x16x128xbf16>
    tpu.vector_store %arg5[%c0_47, %c0_48, %c0_49], %66 {strides = array<i32>} : memref<1x16x128xbf16, #tpu.memory_space<vmem>>, vector<1x16x128xbf16>,
    return
  }
  func.func @transform_0(%arg0: i32, %arg1: i32) -> (i32, i32, i32) {
    %c0_i32 = arith.constant 0 : i32
    %c0_i32_0 = arith.constant 0 : i32
    return %arg0, %c0_i32, %arg1 : i32, i32, i32
  }
  func.func @transform_1(%arg0: i32, %arg1: i32) -> (i32, i32, i32) {
    %c1_i32 = arith.constant 1 : i32
    %0 = arith.addi %arg1, %c1_i32 : i32
    %c1_i32_0 = arith.constant 1 : i32
    %1 = arith.muli %0, %c1_i32_0 : i32
    %c0_i32 = arith.constant 0 : i32
    %c0_i32_1 = arith.constant 0 : i32
    return %arg0, %c0_i32, %1 : i32, i32, i32
  }
  func.func @transform_2(%arg0: i32, %arg1: i32) -> (i32, i32) {
    %c0_i32 = arith.constant 0 : i32
    %c0_i32_0 = arith.constant 0 : i32
    %c0_i32_1 = arith.constant 0 : i32
    return %c0_i32, %c0_i32_0 : i32, i32
  }
  func.func @transform_3(%arg0: i32, %arg1: i32) -> (i32, i32, i32) {
    %c0_i32 = arith.constant 0 : i32
    %c0_i32_0 = arith.constant 0 : i32
    return %arg0, %c0_i32, %arg1 : i32, i32, i32
  }
  func.func @transform_4(%arg0: i32, %arg1: i32) -> (i32, i32, i32, i32) {
    %c0_i32 = arith.constant 0 : i32
    %c0_i32_0 = arith.constant 0 : i32
    %c0_i32_1 = arith.constant 0 : i32
    %c0_i32_2 = arith.constant 0 : i32
    return %arg0, %c0_i32, %c0_i32_0, %c0_i32_1 : i32, i32, i32, i32
  }
}

</mosaic_0001>

<llo_original>
// kernel: tpu_custom_call.1
$region0: #{tpu_custom_call.1}
  #allocation0 [shape = 'u32[]', space=smem, size = 0x4, offset = 0x4, fixed_abs, tag = 'smem constant byte address 0x4 - core index']
  #allocation1 [shape = 'u32[72,128]{1,0:T(1,128)}', space=vmem, size = 0x9000, scoped, tag = 'internal scratch']
  %s0 = inlined_call_operand.vmem [shape: bf16[2,5,256], index: 0, kind: input, shape index: {}]
  %s1 = inlined_call_operand.vmem [shape: bf16[2,5,256], index: 1, kind: input, shape index: {}]
  %s2 = inlined_call_operand.vmem [shape: bf16[16,10], index: 2, kind: input, shape index: {}]
  %s3 = inlined_call_operand.hbm [shape: bf16[2,16,128], index: 3, kind: output, shape index: {0}]
  %s4 = inlined_call_operand.hbm [shape: f32[2,2,16,128], index: 4, kind: output, shape index: {1}]
  %5 = xla_tuple %s3, %s4
  %s6 = sld [smem:[#allocation0]]
  $region65: #{tpu_custom_call.1} parent=0
    _
  %s8 = ssub.s32 1, %s6
  %s9 = scalar_select 0, %s8, %s6
  $region1: #{tpu_custom_call.1} parent=0
    #allocation2 [shape = 'u8[8192]{0}', space=vmem, size = 0x2000, scoped, tag = 'output window, operand 0']
    #allocation3 [shape = 's32[2]{0}', space=sflag, size = 0x8, scoped, tag = 'scoped memory for tpu_custom_call.1']
    #allocation4 [shape = 'u8[32768]{0}', space=vmem, size = 0x8000, scoped, tag = 'output window, operand 1']
    #allocation5 [shape = 's32[2]{0}', space=sflag, size = 0x8, scoped, tag = 'scoped memory for tpu_custom_call.1']
    %10 = vsyncpa [#allocation3], 0
    %s11 = scalar_lea.sflag [#allocation3], 1
    %12 = vsyncpa %s11, 0
    %13 = vsyncpa [#allocation5], 0
    %s14 = scalar_lea.sflag [#allocation5], 1
    %15 = vsyncpa %s14, 0
    loop: start=0, step=1, limit=4
    $region2: #{tpu_custom_call.1} parent=1 // loop_pre_header
      _
    $region3: #{tpu_custom_call.1} parent=1 // loop_header
      %s17 = sphi 0, %s21
      %p18 = scmp.ge.s32.totalorder %s17, 4
      %s24 = sphi 0, %s36
      %s25 = sphi 0, %s32
      %s26 = sphi 0, %s24
      %s27 = sphi 0, %s25
      %s28 = sphi 0, %s26
      %s29 = sphi 0, %s27
      %s41 = sphi 0, %s43
      %s44 = sphi 0, %s41
      %s45 = sphi 0, %s44
      %s61 = sphi 0, %s45
      %s71 = sphi 0, %s73
      %s74 = sphi 0, %s71
      %s75 = sphi 0, %s74
      %s91 = sphi 0, %s75
      %s95 = sphi 0, %s95
      %s97 = sphi 0, %s95
      %s98 = sphi 0, %s97
      %s112 = sphi 0, %s98
      %s120 = sphi 0, %s122
      %s123 = sphi 0, %s120
      %s124 = sphi 0, %s123
      %s140 = sphi 0, %s124
      %s146 = sphi 0, %s148
      %s149 = sphi 0, %s146
      %s150 = sphi 0, %s149
      %s166 = sphi 0, %s150
    $region4: #{tpu_custom_call.1} parent=1 // loop_header_branch
      %20 = sbr.rel (%p18) target = $region8
    $region5: #{tpu_custom_call.1} parent=1 // loop_body
      %s22 = ssub.s32 %s17, 1
      %s23 = ssub.s32 %s17, 2
      %s30 = sadd.s32 1, %s25
      %p31 = scmp.ge.s32.totalorder %s30, 1
      %s32 = scalar_select %p31, 0, %s30
      %s33 = sadd.s32 1, %s24
      %s34 = scalar_select %p31, %s33, %s24
      %p35 = scmp.ge.s32.totalorder %s34, 2
      %s36 = scalar_select %p35, 0, %s34
      %s37 = ssub.s32 %s24, %s36
      %s38 = ssub.s32 %s25, %s32
      %s39 = sor.u32 %s37, %s38
      %p40 = scmp.eq.s32.totalorder %s39, 0
      %s42 = sadd.s32 %s41, 1
      %s43 = scalar_select %p40, %s41, %s42
      %p46 = pneg %p40
      %p47 = scmp.eq.s32.totalorder %s17, 1
      %p48 = por %p46, %p47
      %p49 = scmp.ne.s32.totalorder %s41, %s44
      %p50 = scmp.eq.s32.totalorder %s17, 0
      %p51 = por %p49, %p50
      %p52 = scmp.ne.s32.totalorder %s41, %s44
      %p53 = scmp.eq.s32.totalorder %s22, 1
      %p54 = por %p52, %p53
      %p55 = scmp.ne.s32.totalorder %s44, %s45
      %p56 = scmp.eq.s32.totalorder %s22, 0
      %p57 = por %p55, %p56
      %p58 = scmp.ne.s32.totalorder %s44, %s45
      %p59 = scmp.eq.s32.totalorder %s23, 1
      %p60 = por %p58, %p59
      %p62 = scmp.ne.s32.totalorder %s45, %s61
      %p63 = scmp.eq.s32.totalorder %s23, 0
      %p64 = por %p62, %p63
      %s65 = sadd.s32 %s25, 1
      %s66 = sadd.s32 %s32, 1
      %s67 = ssub.s32 %s24, %s36
      %s68 = ssub.s32 %s65, %s66
      %s69 = sor.u32 %s67, %s68
      %p70 = scmp.eq.s32.totalorder %s69, 0
      %s72 = sadd.s32 %s71, 1
      %s73 = scalar_select %p70, %s71, %s72
      %p76 = pneg %p70
      %p77 = scmp.eq.s32.totalorder %s17, 1
      %p78 = por %p76, %p77
      %p79 = scmp.ne.s32.totalorder %s71, %s74
      %p80 = scmp.eq.s32.totalorder %s17, 0
      %p81 = por %p79, %p80
      %p82 = scmp.ne.s32.totalorder %s71, %s74
      %p83 = scmp.eq.s32.totalorder %s22, 1
      %p84 = por %p82, %p83
      %p85 = scmp.ne.s32.totalorder %s74, %s75
      %p86 = scmp.eq.s32.totalorder %s22, 0
      %p87 = por %p85, %p86
      %p88 = scmp.ne.s32.totalorder %s74, %s75
      %p89 = scmp.eq.s32.totalorder %s23, 1
      %p90 = por %p88, %p89
      %p92 = scmp.ne.s32.totalorder %s75, %s91
      %p93 = scmp.eq.s32.totalorder %s23, 0
      %p94 = por %p92, %p93
      %s96 = sadd.s32 %s95, 1
      %p99 = scmp.eq.s32.totalorder %s17, 1
      %p100 = scmp.ne.s32.totalorder %s95, %s97
      %p101 = scmp.eq.s32.totalorder %s17, 0
      %p102 = por %p100, %p101
      %p103 = scmp.ne.s32.totalorder %s95, %s97
      %p104 = scmp.eq.s32.totalorder %s22, 1
      %p105 = por %p103, %p104
      %p106 = scmp.ne.s32.totalorder %s97, %s98
      %p107 = scmp.eq.s32.totalorder %s22, 0
      %p108 = por %p106, %p107
      %p109 = scmp.ne.s32.totalorder %s97, %s98
      %p110 = scmp.eq.s32.totalorder %s23, 1
      %p111 = por %p109, %p110
      %p113 = scmp.ne.s32.totalorder %s98, %s112
      %p114 = scmp.eq.s32.totalorder %s23, 0
      %p115 = por %p113, %p114
      %s116 = ssub.s32 %s24, %s36
      %s117 = ssub.s32 %s25, %s32
      %s118 = sor.u32 %s116, %s117
      %p119 = scmp.eq.s32.totalorder %s118, 0
      %s121 = sadd.s32 %s120, 1
      %s122 = scalar_select %p119, %s120, %s121
      %p125 = pneg %p119
      %p126 = scmp.eq.s32.totalorder %s17, 1
      %p127 = por %p125, %p126
      %p128 = scmp.ne.s32.totalorder %s120, %s123
      %p129 = scmp.eq.s32.totalorder %s17, 0
      %p130 = por %p128, %p129
      %p131 = scmp.ne.s32.totalorder %s120, %s123
      %p132 = scmp.eq.s32.totalorder %s22, 1
      %p133 = por %p131, %p132
      %p134 = scmp.ne.s32.totalorder %s123, %s124
      %p135 = scmp.eq.s32.totalorder %s22, 0
      %p136 = por %p134, %p135
      %p137 = scmp.ne.s32.totalorder %s123, %s124
      %p138 = scmp.eq.s32.totalorder %s23, 1
      %p139 = por %p137, %p138
      %p141 = scmp.ne.s32.totalorder %s124, %s140
      %p142 = scmp.eq.s32.totalorder %s23, 0
      %p143 = por %p141, %p142
      %s144 = ssub.s32 %s24, %s36
      %p145 = scmp.eq.s32.totalorder %s144, 0
      %s147 = sadd.s32 %s146, 1
      %s148 = scalar_select %p145, %s146, %s147
      %p151 = pneg %p145
      %p152 = scmp.eq.s32.totalorder %s17, 1
      %p153 = por %p151, %p152
      %p154 = scmp.ne.s32.totalorder %s146, %s149
      %p155 = scmp.eq.s32.totalorder %s17, 0
      %p156 = por %p154, %p155
      %p157 = scmp.ne.s32.totalorder %s146, %s149
      %p158 = scmp.eq.s32.totalorder %s22, 1
      %p159 = por %p157, %p158
      %p160 = scmp.ne.s32.totalorder %s149, %s150
      %p161 = scmp.eq.s32.totalorder %s22, 0
      %p162 = por %p160, %p161
      %p163 = scmp.ne.s32.totalorder %s149, %s150
      %p164 = scmp.eq.s32.totalorder %s23, 1
      %p165 = por %p163, %p164
      %p167 = scmp.ne.s32.totalorder %s150, %s166
      %p168 = scmp.eq.s32.totalorder %s23, 0
      %p169 = por %p167, %p168
      %p170 = scmp.le.s32.totalorder 1, %s17
      %p171 = scmp.lt.s32.totalorder %s17, 3
      %p172 = pnand %p170, %p171
      %p173 = pneg %p172
      // Predicated region
      $region9: #{tpu_custom_call.1} parent=5 // pred_check
        _
      $region10: #{tpu_custom_call.1} parent=5 // pred_check_branch
        %175 = sbr.rel (%p172) target = $region12
      $region11: #{tpu_custom_call.1} parent=5 // pred_region
        %s176 = ssub.s32 %s17, 1
        // Predicated region
        $region13: #{tpu_custom_call.1} parent=11 // pred_check
          %p177 = pneg %p108
        $region14: #{tpu_custom_call.1} parent=11 // pred_check_branch
          %179 = sbr.rel (%p177) target = $region16
        $region15: #{tpu_custom_call.1} parent=11 // pred_region
          _
        $region16: #{tpu_custom_call.1} parent=11 // pred_fallthru
          _
      $region12: #{tpu_custom_call.1} parent=5 // pred_fallthru
        _
      %p180 = scmp.lt.s32.totalorder %s17, 2
      // Predicated region
      $region17: #{tpu_custom_call.1} parent=5 // pred_check
        %p181 = pneg %p180
      $region18: #{tpu_custom_call.1} parent=5 // pred_check_branch
        %183 = sbr.rel (%p181) target = $region20
      $region19: #{tpu_custom_call.1} parent=5 // pred_region
        // Predicated region
        $region21: #{tpu_custom_call.1} parent=19 // pred_check
          %p184 = pneg %p51
        $region22: #{tpu_custom_call.1} parent=19 // pred_check_branch
          %186 = sbr.rel (%p184) target = $region24
        $region23: #{tpu_custom_call.1} parent=19 // pred_region
          %p187 = scmp.lt.s32.totalorder %s24, 1
          %s188 = scalar_select %p187, %s24, 1
          %p189 = scmp.lt.s32.totalorder %s25, 1
          %s190 = scalar_select %p189, %s25, 1
          %s191 = smul.addr %s188, 2
          %s192 = sadd.s32 %s190, %s191
          %s193 = smul.addr %s192, 4
          %s194 = scalar_lea.vmem %s0, %s193
        $region24: #{tpu_custom_call.1} parent=19 // pred_fallthru
          _
        // Predicated region
        $region25: #{tpu_custom_call.1} parent=19 // pred_check
          %p195 = pneg %p81
        $region26: #{tpu_custom_call.1} parent=19 // pred_check_branch
          %197 = sbr.rel (%p195) target = $region28
        $region27: #{tpu_custom_call.1} parent=19 // pred_region
          %s198 = sadd.s32 %s25, 1
          %p199 = scmp.lt.s32.totalorder %s24, 1
          %s200 = scalar_select %p199, %s24, 1
          %p201 = scmp.lt.s32.totalorder %s198, 1
          %s202 = scalar_select %p201, %s198, 1
          %s203 = smul.addr %s200, 2
          %s204 = sadd.s32 %s202, %s203
          %s205 = smul.addr %s204, 4
          %s206 = scalar_lea.vmem %s1, %s205
          %s207 = sadd.s32 %s25, 1
        $region28: #{tpu_custom_call.1} parent=19 // pred_fallthru
          _
      $region20: #{tpu_custom_call.1} parent=5 // pred_fallthru
        _
      %p208 = scmp.le.s32.totalorder 1, %s17
      %p209 = scmp.lt.s32.totalorder %s17, 3
      %p210 = pnand %p208, %p209
      %p211 = pneg %p210
      // Predicated region
      $region29: #{tpu_custom_call.1} parent=5 // pred_check
        _
      $region30: #{tpu_custom_call.1} parent=5 // pred_check_branch
        %213 = sbr.rel (%p210) target = $region32
      $region31: #{tpu_custom_call.1} parent=5 // pred_region
        %s214 = ssub.s32 %s17, 1
        %p215 = scmp.lt.s32.totalorder %s26, 1
        %s216 = scalar_select %p215, %s26, 1
        %p217 = scmp.lt.s32.totalorder %s27, 1
        %s218 = scalar_select %p217, %s27, 1
        %s219 = smul.addr %s216, 2
        %s220 = sadd.s32 %s218, %s219
        %s221 = smul.addr %s220, 4
        %s222 = scalar_lea.vmem %s0, %s221
        %p223 = pneg %p57
        %p224 = pneg %p54
        %s225 = sadd.s32 %s27, 1
        %p226 = scmp.lt.s32.totalorder %s26, 1
        %s227 = scalar_select %p226, %s26, 1
        %p228 = scmp.lt.s32.totalorder %s225, 1
        %s229 = scalar_select %p228, %s225, 1
        %s230 = smul.addr %s227, 2
        %s231 = sadd.s32 %s229, %s230
        %s232 = smul.addr %s231, 4
        %s233 = scalar_lea.vmem %s1, %s232
        %p234 = pneg %p87
        %p235 = pneg %p84
        %p236 = pneg %p108
        %p237 = pneg %p105
        %p238 = pneg %p136
        %p239 = pneg %p133
        %s240 = sand.u32 %s123, 1
        %s241 = scalar_lea.sflag [#allocation3], %s240
        %s242 = sand.u32 %s123, 1
        %s243 = smul.addr %s242, 8
        %s244 = scalar_lea.vmem [#allocation2], %s243
        %p245 = pneg %p162
        %p246 = pneg %p159
        %s247 = sand.u32 %s149, 1
        %s248 = scalar_lea.sflag [#allocation5], %s247
        %s249 = sand.u32 %s149, 1
        %s250 = smul.addr %s249, 32
        %s251 = scalar_lea.vmem [#allocation4], %s250
        %p252 = scmp.lt.s32.totalorder %s26, 1
        %s253 = scalar_select %p252, %s26, 1
        %p254 = scmp.lt.s32.totalorder %s27, 1
        %s255 = scalar_select %p254, %s27, 1
        %s256 = smul.addr %s253, 2
        %s257 = sadd.s32 %s255, %s256
        %s258 = smul.addr %s257, 4
        %s259 = scalar_lea.vmem %s0, %s258
        %s260 = sadd.s32 %s27, 1
        %p261 = scmp.lt.s32.totalorder %s26, 1
        %s262 = scalar_select %p261, %s26, 1
        %p263 = scmp.lt.s32.totalorder %s260, 1
        %s264 = scalar_select %p263, %s260, 1
        %s265 = smul.addr %s262, 2
        %s266 = sadd.s32 %s264, %s265
        %s267 = smul.addr %s266, 4
        %s268 = scalar_lea.vmem %s1, %s267
        %s269 = sadd.s32 %s27, 1
        %p271 = scmp.eq.s32.totalorder %s27, 0
        // Predicated region
        $region33: #{tpu_custom_call.1} parent=31 // pred_check
          %p272 = pneg %p271
        $region34: #{tpu_custom_call.1} parent=31 // pred_check_branch
          %274 = sbr.rel (%p272) target = $region36
        $region35: #{tpu_custom_call.1} parent=31 // pred_region
          %275 = vst [vmem:[%s251] sm:$0xff] 0.0
          %276 = vst [vmem:[%s251 + $0x8] sm:$0xff] 0.0
          %277 = vst [vmem:[%s251 + $0x10] sm:$0xff] 0.0
          %278 = vst [vmem:[%s251 + $0x18] sm:$0xff] 0.0
        $region36: #{tpu_custom_call.1} parent=31 // pred_fallthru
          _
        %v279 = vld [vmem:[%s259] sm:$0x1]
        %v280 = vunpack.c.l.bf16 %v279
        %v281 = vld [vmem:[%s259] sm:$0x2]
        %v282 = vunpack.c.l.bf16 %v281
        %v283 = vld [vmem:[%s259] sm:$0x4]
        %v284 = vunpack.c.l.bf16 %v283
        %v285 = vld [vmem:[%s268] sm:$0x1]
        %v286 = vunpack.c.l.bf16 %v285
        %288 = vrot.lane.b32.xlu0 %v280, 127
        %v289 = vpop.permute.xlu0 %288
        %292 = vrot.lane.b32.xlu0 %v286, 127
        %v293 = vpop.permute.xlu0 %292
        %vm295 = vcmask 1039360
        %v296 = vsel %vm295, %v289, %v293
        %v297 = vld [vmem:[%s268] sm:$0x2]
        %v298 = vunpack.c.l.bf16 %v297
        %300 = vrot.lane.b32.xlu0 %v282, 127
        %v301 = vpop.permute.xlu0 %300
        %304 = vrot.lane.b32.xlu0 %v298, 127
        %v305 = vpop.permute.xlu0 %304
        %v307 = vsel %vm295, %v301, %v305
        %v308 = vld [vmem:[%s268] sm:$0x4]
        %v309 = vunpack.c.l.bf16 %v308
        %311 = vrot.lane.b32.xlu0 %v284, 127
        %v312 = vpop.permute.xlu0 %311
        %315 = vrot.lane.b32.xlu0 %v309, 127
        %v316 = vpop.permute.xlu0 %315
        %v318 = vsel %vm295, %v312, %v316
        %v320 = vrot.slane %v296, 3
        %v323 = vrot.slane %v307, 3
        %v326 = vrot.slane %v318, 3
        %vm328 = vcmask 1040384
        %vm329 = vcmask 1041408
        %v330 = vsel %vm329, %v280, %v282
        %vm331 = vcmask 1042432
        %v332 = vsel %vm331, %v330, %v282
        %vm333 = vcmask 1043456
        %v334 = vsel %vm333, %v332, %v284
        %vm335 = vcmask 1044480
        %v336 = vsel %vm335, %v334, %v320
        %vm337 = vcmask 1045504
        %v338 = vsel %vm337, %v336, %v320
        %vm339 = vcmask 1046528
        %v340 = vsel %vm339, %v338, %v323
        %v341 = vsel %vm328, %v323, %v326
        %v342 = vpack.c.bf16 %v341, %v340
        %v343 = vld [vmem:[%s2] sm:$0xf]
        %v344 = vld [vmem:[%s2 + $0x4] sm:$0xf]
        %v347 = vunpack.c.l.b16 %v343
        %v348 = vunpack.c.l.b16 %v344
        %v349 = vpack.c.b16 %v348, %v347
        %vm350 = vcmask 80896
        %v352 = vsel %vm350, %v349, 0
        %v355 = vsel %vm335, %v342, 0
        %357 = vmatpush.bf16.msra.mxu0 0
        %358 = vmatpush.bf16.msra.mxu0 0
        %359 = vmatpush.bf16.msra.mxu0 0
        %360 = vmatpush.bf16.msra.mxu0 0
        %361 = vmatpush.bf16.msra.mxu0 0
        %362 = vmatpush.bf16.msra.mxu0 0
        %363 = vmatpush.bf16.msra.mxu0 0
        %364 = vmatpush.bf16.msra.mxu0 %v355
        %365 = vmatmul.bf16.gmra.mxu0 %v352
        %v366 = vpop.f32.mrf.mxu0
        %v367 = vadd.f32 0.0, %v366
        %v368 = vpop.f32.mrf.mxu0
        %v369 = vadd.f32 0.0, %v368
        %370 = vdwg.mxu0
        %p371 = scmp.lt.s32.totalorder %s27, 0
        // Predicated region
        $region37: #{tpu_custom_call.1} parent=31 // pred_check
          %p372 = pneg %p371
        $region38: #{tpu_custom_call.1} parent=31 // pred_check_branch
          %374 = sbr.rel (%p372) target = $region40
        $region39: #{tpu_custom_call.1} parent=31 // pred_region
          %v375 = vadd.f32 %v367, 0.0
          %v376 = vadd.f32 %v369, 0.0
          %v377 = vmul.f32 %v367, %v367
          %v378 = vmul.f32 %v369, %v369
          %v379 = vadd.f32 %v377, 0.0
          %v380 = vadd.f32 %v378, 0.0
          %v381 = vld [vmem:[%s251] sm:$0xff]
          %v382 = vld [vmem:[%s251 + $0x8] sm:$0xff]
          %v383 = vadd.f32 %v381, %v375
          %v384 = vadd.f32 %v382, %v376
          %385 = vst [vmem:[%s251] sm:$0xff] %v383
          %386 = vst [vmem:[%s251 + $0x8] sm:$0xff] %v384
          %s387 = scalar_lea.vmem %s251, 16 [#allocation4]
          %v388 = vld [vmem:[%s387] sm:$0xff]
          %v389 = vld [vmem:[%s387 + $0x8] sm:$0xff]
          %v390 = vadd.f32 %v388, %v379
          %v391 = vadd.f32 %v389, %v380
          %392 = vst [vmem:[%s387] sm:$0xff] %v390
          %393 = vst [vmem:[%s387 + $0x8] sm:$0xff] %v391
        $region40: #{tpu_custom_call.1} parent=31 // pred_fallthru
          _
        // Predicated region
        $region41: #{tpu_custom_call.1} parent=31 // pred_check
          %p394 = pneg %p271
        $region42: #{tpu_custom_call.1} parent=31 // pred_check_branch
          %396 = sbr.rel (%p394) target = $region44
        $region43: #{tpu_custom_call.1} parent=31 // pred_region
          %v397 = vlaneseq
          %v398 = vand.u32 %v397, 127
          %vm399 = vcmp.lt.s32.totalorder %v398, 50
          %v400 = vsel %vm399, 1, 0
          %vm401 = vcmp.eq.s32.totalorder %v400, 1
          %v402 = vsel %vm401, %v367, 0.0
          %v403 = vsel %vm401, %v369, 0.0
          %v404 = vadd.f32 %v402, 0.0
          %v405 = vadd.f32 %v403, 0.0
          %v406 = vmul.f32 %v402, %v402
          %v407 = vmul.f32 %v403, %v403
          %v408 = vadd.f32 %v406, 0.0
          %v409 = vadd.f32 %v407, 0.0
          %v410 = vld [vmem:[%s251] sm:$0xff]
          %v411 = vld [vmem:[%s251 + $0x8] sm:$0xff]
          %v412 = vadd.f32 %v410, %v404
          %v413 = vadd.f32 %v411, %v405
          %414 = vst [vmem:[%s251] sm:$0xff] %v412
          %415 = vst [vmem:[%s251 + $0x8] sm:$0xff] %v413
          %s416 = scalar_lea.vmem %s251, 16 [#allocation4]
          %v417 = vld [vmem:[%s416] sm:$0xff]
          %v418 = vld [vmem:[%s416 + $0x8] sm:$0xff]
          %v419 = vadd.f32 %v417, %v408
          %v420 = vadd.f32 %v418, %v409
          %421 = vst [vmem:[%s416] sm:$0xff] %v419
          %422 = vst [vmem:[%s416 + $0x8] sm:$0xff] %v420
        $region44: #{tpu_custom_call.1} parent=31 // pred_fallthru
          _
        %v423 = vpack.c.bf16 %v367, %v367
        %v424 = vpack.c.bf16 %v369, %v369
        %425 = vst [vmem:[%s244] sm:$0xf] %v423
        %426 = vst [vmem:[%s244 + $0x4] sm:$0xf] %v424
        %s427 = sand.u32 %s123, 1
        %s428 = scalar_lea.sflag [#allocation3], %s427
        %s429 = sand.u32 %s123, 1
        %s430 = smul.addr %s429, 8
        %s431 = scalar_lea.vmem [#allocation2], %s430
        %s432 = sand.u32 %s149, 1
        %s433 = scalar_lea.sflag [#allocation5], %s432
        %s434 = sand.u32 %s149, 1
        %s435 = smul.addr %s434, 32
        %s436 = scalar_lea.vmem [#allocation4], %s435
        // Predicated region
        $region45: #{tpu_custom_call.1} parent=31 // pred_check
          %p437 = pneg %p133
        $region46: #{tpu_custom_call.1} parent=31 // pred_check_branch
          %439 = sbr.rel (%p437) target = $region48
        $region47: #{tpu_custom_call.1} parent=31 // pred_region
          %441 = vsyncadd %s428, 0
          %s442 = smul.addr %s26, 2
          %s443 = sadd.s32 %s27, %s442
          %s444 = smul.addr %s443, 4
          %s445 = scalar_lea.hbm %s3, %s444
          %s446 = sshll.u32 %s431, 4
          %s447 = int_to_ptr.vmem [resolvable:$true] %s446
          %s448 = sshll.u32 %s445, 4
          %s449 = int_to_ptr.hbm [resolvable:$true] %s448
          %454 = dma.vmem_to_hbm [thread:$0]  %s447, 128, %s449, %s428, 64, 64, 4
        $region48: #{tpu_custom_call.1} parent=31 // pred_fallthru
          _
        // Predicated region
        $region49: #{tpu_custom_call.1} parent=31 // pred_check
          %p455 = pneg %p159
        $region50: #{tpu_custom_call.1} parent=31 // pred_check_branch
          %457 = sbr.rel (%p455) target = $region52
        $region51: #{tpu_custom_call.1} parent=31 // pred_region
          %459 = vsyncadd %s433, 0
          %s460 = smul.addr %s26, 4
          %s461 = smul.addr %s460, 8
          %s462 = scalar_lea.hbm %s4, %s461
          %s463 = sshll.u32 %s436, 4
          %s464 = int_to_ptr.vmem [resolvable:$true] %s463
          %s465 = sshll.u32 %s462, 4
          %s466 = int_to_ptr.hbm [resolvable:$true] %s465
          %471 = dma.vmem_to_hbm [thread:$0]  %s464, 512, %s466, %s433, 128, 128, 8
        $region52: #{tpu_custom_call.1} parent=31 // pred_fallthru
          _
      $region32: #{tpu_custom_call.1} parent=5 // pred_fallthru
        _
      %p472 = scmp.le.s32.totalorder 2, %s17
      // Predicated region
      $region53: #{tpu_custom_call.1} parent=5 // pred_check
        %p473 = pneg %p472
      $region54: #{tpu_custom_call.1} parent=5 // pred_check_branch
        %475 = sbr.rel (%p473) target = $region56
      $region55: #{tpu_custom_call.1} parent=5 // pred_region
        %s476 = ssub.s32 %s17, 2
        // Predicated region
        $region57: #{tpu_custom_call.1} parent=55 // pred_check
          %p477 = pneg %p139
        $region58: #{tpu_custom_call.1} parent=55 // pred_check_branch
          %479 = sbr.rel (%p477) target = $region60
        $region59: #{tpu_custom_call.1} parent=55 // pred_region
          %s480 = sand.u32 %s124, 1
          %s481 = scalar_lea.sflag [#allocation3], %s480
          %s482 = sand.u32 %s124, 1
          %s483 = smul.addr %s482, 8
          %s484 = scalar_lea.vmem [#allocation2], %s483
          %486 = dma.done %s481, 128
        $region60: #{tpu_custom_call.1} parent=55 // pred_fallthru
          _
        // Predicated region
        $region61: #{tpu_custom_call.1} parent=55 // pred_check
          %p487 = pneg %p165
        $region62: #{tpu_custom_call.1} parent=55 // pred_check_branch
          %489 = sbr.rel (%p487) target = $region64
        $region63: #{tpu_custom_call.1} parent=55 // pred_region
          %s490 = sand.u32 %s150, 1
          %s491 = scalar_lea.sflag [#allocation5], %s490
          %s492 = sand.u32 %s150, 1
          %s493 = smul.addr %s492, 32
          %s494 = scalar_lea.vmem [#allocation4], %s493
          %496 = dma.done %s491, 512
        $region64: #{tpu_custom_call.1} parent=55 // pred_fallthru
          _
      $region56: #{tpu_custom_call.1} parent=5 // pred_fallthru
        _
    $region6: #{tpu_custom_call.1} parent=1 // loop_footer
      %s21 = sadd.s32 1, %s17
    $region7: #{tpu_custom_call.1} parent=1 // loop_footer_branch
      %16 = sbr.rel target = $region3
    $region8: #{tpu_custom_call.1} parent=1 // loop_exit
      _
    %497 = vsyncpa [#allocation3], 1
    %s498 = scalar_lea.sflag [#allocation3], 1
    %499 = vsyncpa %s498, 1
    %500 = vsyncpa [#allocation5], 1
    %s501 = scalar_lea.sflag [#allocation5], 1
    %502 = vsyncpa %s501, 1

</llo_original>
